<compile_context>
chip_gen: v7x
topology: tpu7x:2x2x1
jax: 0.10.0
libtpu: 0.0.40
codegen_flags: <defaults>
</compile_context>

<pallas_src>
import functools

import jax
import jax.numpy as jnp
from jax.experimental import pallas as pl
from jax.experimental.pallas import tpu as pltpu


def _focal_loss_kernel(x_ref, t_ref, out_ref, *, gamma, alpha):
    x = x_ref[...].astype(jnp.float32)          # (C, T): classes on sublanes
    t = t_ref[...]                              # (1, T): int32 targets on lanes

    # log_softmax over the class (sublane) axis.
    m = jnp.max(x, axis=0, keepdims=True)       # (1, T)
    z = x - m
    lse = jnp.log(jnp.sum(jnp.exp(z), axis=0, keepdims=True))
    logp = z - lse                              # (C, T)

    # Gather logp at the target class via one-hot (no dynamic gather on TPU).
    cls_ids = jax.lax.broadcasted_iota(jnp.int32, x.shape, 0)       # (C, T)
    onehot = (cls_ids == t).astype(jnp.float32)                     # (C, T)
    logpt = jnp.sum(logp * onehot, axis=0, keepdims=True)           # (1, T)
    pt = jnp.exp(logpt)

    if alpha is not None:
        # alpha gather as a short compare/select chain on the (1, T) lane
        # vector (cheap VPU work; no second iota / one-hot / reduction).
        at = jnp.zeros_like(logpt)
        for ci, av in enumerate(alpha):
            at = jnp.where(t == ci, jnp.float32(av), at)
        logpt = logpt * at

    # Focal weighting with gamma specialization.
    if gamma == 0.0:
        loss = -logpt
    else:
        omp = 1.0 - pt
        g = float(gamma)
        if g.is_integer() and 0.0 < g <= 8.0:
            w = omp
            for _ in range(int(g) - 1):
                w = w * omp                     # repeated multiplies (VALU)
        else:
            w = jnp.power(omp, jnp.float32(g))  # general fallback (EUP)
        loss = -w * logpt

    # One cross-lane reduce per (large) block; write the block's partial sum
    # as a lane-dense (8, 128) tile so the store is a full unmasked vst.
    out_ref[...] = jnp.full(out_ref.shape, jnp.sum(loss), dtype=out_ref.dtype)


def _pick_tile_hw(hw, c, itemsize, budget_bytes):
    """Largest pixel tile that divides hw exactly and keeps one logits block
    within budget_bytes. A whole-row block (tile == hw) is always legal."""
    if hw * c * itemsize <= budget_bytes:
        return hw
    if hw % 128 != 0:
        # TODO(synk): pad+mask path for very large spatial sizes that are not
        # a multiple of 128; fall back to one whole-row block for now.
        return hw
    cap = max(128, (budget_bytes // (c * itemsize)) // 128 * 128)
    t = min(cap, hw)
    t -= t % 128
    while hw % t != 0:
        t -= 128
    return t


def focal_loss(logits, target, *, gamma=0.0, alpha=None, size_average=True,
               block_bytes=2 * 1024 * 1024):
    """Pallas-TPU FocalLoss forward (matches the PyTorch module's forward).

    logits : (N, C, *spatial) float32/bfloat16, or (rows, C) for the 2-D path
    target : (N, *spatial) int (values in [0, C)), or (rows,)
    alpha  : None | float | list of per-class floats (as in the module init)
    """
    if logits.ndim == 2:
        # Rare 2-D path of the PyTorch forward (no fused-transpose benefit).
        R, C = logits.shape
        x = jnp.transpose(logits, (1, 0)).reshape(1, C, R)
        t = target.reshape(1, 1, R).astype(jnp.int32)
        N, HW = 1, R
    else:
        N, C = logits.shape[0], logits.shape[1]
        HW = 1
        for d in logits.shape[2:]:
            HW *= d
        x = logits.reshape(N, C, HW)            # free view: NO transpose
        t = target.reshape(N, 1, HW).astype(jnp.int32)

    # alpha handling mirrors the PyTorch __init__, baked in as constants.
    if alpha is None:
        alpha_t = None
    else:
        if isinstance(alpha, (float, int)):
            a_list = [float(alpha), 1.0 - float(alpha)]
        else:
            a_list = [float(v) for v in alpha]
        if len(a_list) < C:
            raise ValueError(
                f"alpha has {len(a_list)} entries but input has {C} classes "
                "(PyTorch's alpha.gather would raise an index error too).")
        alpha_t = tuple(a_list[:C])

    tile_hw = _pick_tile_hw(HW, C, jnp.dtype(x.dtype).itemsize, block_bytes)
    n_blk = HW // tile_hw

    kernel = functools.partial(_focal_loss_kernel,
                               gamma=float(gamma), alpha=alpha_t)

    partials = pl.pallas_call(
        kernel,
        out_shape=jax.ShapeDtypeStruct((N, n_blk, 8, 128), jnp.float32),
        grid_spec=pltpu.PrefetchScalarGridSpec(
            num_scalar_prefetch=0,
            grid=(N, n_blk),
            in_specs=[
                pl.BlockSpec((None, C, tile_hw), lambda n, j: (n, 0, j)),  # logits
                pl.BlockSpec((None, 1, tile_hw), lambda n, j: (n, 0, j)),  # targets
            ],
            out_specs=pl.BlockSpec((None, None, 8, 128),
                                   lambda n, j: (n, j, 0, 0)),
        ),
        compiler_params=pltpu.CompilerParams(
            dimension_semantics=("parallel", "parallel")),
    )(x, t)

    # Tiny cross-block reduction in plain JAX (one scalar per block).
    total = jnp.sum(partials[:, :, 0, 0])
    if size_average:
        total = total / jnp.float32(N * HW)
    return total


def _focal_loss_ref(logits, target, *, gamma, alpha, size_average):
    N, C = logits.shape[0], logits.shape[1]
    x = jnp.moveaxis(logits.reshape(N, C, -1), 1, 2).reshape(-1, C)
    x = x.astype(jnp.float32)
    t = target.reshape(-1).astype(jnp.int32)
    logp = jax.nn.log_softmax(x, axis=1)
    logpt = jnp.take_along_axis(logp, t[:, None], axis=1)[:, 0]
    pt = jnp.exp(logpt)
    if alpha is not None:
        if isinstance(alpha, (float, int)):
            a = jnp.array([alpha, 1.0 - alpha], jnp.float32)
        else:
            a = jnp.asarray(alpha, jnp.float32)
        logpt = logpt * a[t]
    loss = -1.0 * (1.0 - pt) ** gamma * logpt
    return jnp.mean(loss) if size_average else jnp.sum(loss)


if __name__ == "__main__":
    key = jax.random.PRNGKey(0)
    k1, k2 = jax.random.split(key)

    N, C, H, W = 2, 4, 16, 16
    logits = jax.random.normal(k1, (N, C, H, W), jnp.float32)
    target = jax.random.randint(k2, (N, H, W), 0, C, jnp.int32)

    # Config 1: per-class alpha, gamma=2 (common focal setting), mean.
    gamma = 2.0
    alpha = [0.25, 0.75, 0.5, 0.9]
    out = focal_loss(logits, target, gamma=gamma, alpha=alpha, size_average=True)
    out = jax.block_until_ready(out)
    ref = _focal_loss_ref(logits, target, gamma=gamma, alpha=alpha,
                          size_average=True)
    assert jnp.allclose(out, ref, rtol=5e-5, atol=1e-6), (out, ref)

    # Config 2: no alpha, gamma=0 (plain NLL), sum reduction.
    out2 = focal_loss(logits, target, gamma=0.0, alpha=None, size_average=False)
    out2 = jax.block_until_ready(out2)
    ref2 = _focal_loss_ref(logits, target, gamma=0.0, alpha=None,
                           size_average=False)
    assert jnp.allclose(out2, ref2, rtol=5e-5, atol=1e-5), (out2, ref2)

    print("KERNEL_OK")
</pallas_src>

<mosaic_0001>
module attributes {stable_mosaic.version = 11 : i64} {
  func.func @_focal_loss_kernel(%arg0: i32, %arg1: i32, %arg2: memref<1x4x256xf32, #tpu.memory_space<vmem>>, %arg3: memref<1x1x256xi32, #tpu.memory_space<vmem>>, %arg4: memref<1x1x8x128xf32, #tpu.memory_space<vmem>>) attributes {dimension_semantics = [#tpu.dimension_semantics<parallel>, #tpu.dimension_semantics<parallel>], iteration_bounds = array<i64: 2, 1>, scalar_prefetch = 0 : i64, scratch_operands = 0 : i64, tpu.core_type = #tpu.core_type<tc>, window_params = [{transform_indices = @transform_0, window_bounds = array<i64: 1, 4, 256>}, {transform_indices = @transform_1, window_bounds = array<i64: 1, 1, 256>}, {transform_indices = @transform_2, window_bounds = array<i64: 1, 1, 8, 128>}]} {
    %c0 = arith.constant 0 : index
    %c0_0 = arith.constant 0 : index
    %c0_1 = arith.constant 0 : index
    %0 = vector.load %arg2[%c0, %c0_0, %c0_1] : memref<1x4x256xf32, #tpu.memory_space<vmem>>, vector<1x4x256xf32>
    %1 = vector.shape_cast %0 : vector<1x4x256xf32> to vector<4x256xf32>
    %c0_2 = arith.constant 0 : index
    %c0_3 = arith.constant 0 : index
    %c0_4 = arith.constant 0 : index
    %2 = vector.load %arg3[%c0_2, %c0_3, %c0_4] : memref<1x1x256xi32, #tpu.memory_space<vmem>>, vector<1x1x256xi32>
    %3 = vector.shape_cast %2 : vector<1x1x256xi32> to vector<1x256xi32>
    %cst = arith.constant dense<0xFF800000> : vector<256xf32>
    %4 = vector.multi_reduction <maximumf>, %1, %cst [0] : vector<4x256xf32> to vector<256xf32>
    %5 = vector.shape_cast %4 : vector<256xf32> to vector<1x256xf32>
    %6 = vector.broadcast %5 : vector<1x256xf32> to vector<4x256xf32>
    %7 = arith.subf %1, %6 : vector<4x256xf32>
    %8 = math.exp %7 : vector<4x256xf32>
    %cst_5 = arith.constant dense<0.000000e+00> : vector<256xf32>
    %9 = vector.multi_reduction <add>, %8, %cst_5 [0] : vector<4x256xf32> to vector<256xf32>
    %10 = vector.shape_cast %9 : vector<256xf32> to vector<1x256xf32>
    %11 = math.log %10 : vector<1x256xf32>
    %12 = vector.broadcast %11 : vector<1x256xf32> to vector<4x256xf32>
    %13 = arith.subf %7, %12 : vector<4x256xf32>
    %14 = tpu.iota {dimensions = array<i32: 0>} : vector<4x256xi32>
    %15 = vector.broadcast %3 : vector<1x256xi32> to vector<4x256xi32>
    %16 = arith.cmpi eq, %14, %15 : vector<4x256xi32>
    %17 = arith.extui %16 : vector<4x256xi1> to vector<4x256xi32>
    %18 = arith.sitofp %17 : vector<4x256xi32> to vector<4x256xf32>
    %19 = arith.mulf %13, %18 : vector<4x256xf32>
    %cst_6 = arith.constant dense<0.000000e+00> : vector<256xf32>
    %20 = vector.multi_reduction <add>, %19, %cst_6 [0] : vector<4x256xf32> to vector<256xf32>
    %21 = vector.shape_cast %20 : vector<256xf32> to vector<1x256xf32>
    %22 = math.exp %21 : vector<1x256xf32>
    %cst_7 = arith.constant 0.000000e+00 : f32
    %23 = vector.broadcast %cst_7 : f32 to vector<1x256xf32>
    %c0_i32 = arith.constant 0 : i32
    %24 = vector.broadcast %c0_i32 : i32 to vector<1x256xi32>
    %25 = arith.cmpi eq, %3, %24 : vector<1x256xi32>
    %cst_8 = arith.constant 2.500000e-01 : f32
    %26 = vector.broadcast %cst_8 : f32 to vector<1x256xf32>
    %27 = arith.select %25, %26, %23 : vector<1x256xi1>, vector<1x256xf32>
    %c1_i32 = arith.constant 1 : i32
    %28 = vector.broadcast %c1_i32 : i32 to vector<1x256xi32>
    %29 = arith.cmpi eq, %3, %28 : vector<1x256xi32>
    %cst_9 = arith.constant 7.500000e-01 : f32
    %30 = vector.broadcast %cst_9 : f32 to vector<1x256xf32>
    %31 = arith.select %29, %30, %27 : vector<1x256xi1>, vector<1x256xf32>
    %c2_i32 = arith.constant 2 : i32
    %32 = vector.broadcast %c2_i32 : i32 to vector<1x256xi32>
    %33 = arith.cmpi eq, %3, %32 : vector<1x256xi32>
    %cst_10 = arith.constant 5.000000e-01 : f32
    %34 = vector.broadcast %cst_10 : f32 to vector<1x256xf32>
    %35 = arith.select %33, %34, %31 : vector<1x256xi1>, vector<1x256xf32>
    %c3_i32 = arith.constant 3 : i32
    %36 = vector.broadcast %c3_i32 : i32 to vector<1x256xi32>
    %37 = arith.cmpi eq, %3, %36 : vector<1x256xi32>
    %cst_11 = arith.constant 0.899999976 : f32
    %38 = vector.broadcast %cst_11 : f32 to vector<1x256xf32>
    %39 = arith.select %37, %38, %35 : vector<1x256xi1>, vector<1x256xf32>
    %40 = arith.mulf %21, %39 : vector<1x256xf32>
    %cst_12 = arith.constant 1.000000e+00 : f32
    %41 = vector.broadcast %cst_12 : f32 to vector<1x256xf32>
    %42 = arith.subf %41, %22 : vector<1x256xf32>
    %43 = arith.mulf %42, %42 : vector<1x256xf32>
    %cst_13 = arith.constant 0.000000e+00 : f32
    %44 = vector.broadcast %cst_13 : f32 to vector<1x256xf32>
    %45 = arith.subf %44, %43 : vector<1x256xf32>
    %46 = arith.mulf %45, %40 : vector<1x256xf32>
    %47 = vector.shape_cast %46 : vector<1x256xf32> to vector<1x1x256xf32>
    %cst_14 = arith.constant dense<0.000000e+00> : vector<1xf32>
    %48 = vector.multi_reduction <add>, %47, %cst_14 [1, 2] : vector<1x1x256xf32> to vector<1xf32>
    %49 = vector.shape_cast %48 : vector<1xf32> to vector<1x1x1xf32>
    %50 = vector.extract %49[0, 0, 0] : f32 from vector<1x1x1xf32>
    %51 = vector.broadcast %50 : f32 to vector<8x128xf32>
    %c0_15 = arith.constant 0 : index
    %c0_16 = arith.constant 0 : index
    %c0_17 = arith.constant 0 : index
    %c0_18 = arith.constant 0 : index
    %52 = vector.load %arg4[%c0_15, %c0_16, %c0_17, %c0_18] : memref<1x1x8x128xf32, #tpu.memory_space<vmem>>, vector<1x1x8x128xf32>
    %53 = vector.shape_cast %52 : vector<1x1x8x128xf32> to vector<8x128xf32>
    %54 = vector.shape_cast %51 : vector<8x128xf32> to vector<1x1x8x128xf32>
    tpu.vector_store %arg4[%c0_15, %c0_16, %c0_17, %c0_18], %54 {strides = array<i32>} : memref<1x1x8x128xf32, #tpu.memory_space<vmem>>, vector<1x1x8x128xf32>,
    return
  }
  func.func @transform_0(%arg0: i32, %arg1: i32) -> (i32, i32, i32) {
    %c0_i32 = arith.constant 0 : i32
    %c0_i32_0 = arith.constant 0 : i32
    return %arg0, %c0_i32, %arg1 : i32, i32, i32
  }
  func.func @transform_1(%arg0: i32, %arg1: i32) -> (i32, i32, i32) {
    %c0_i32 = arith.constant 0 : i32
    %c0_i32_0 = arith.constant 0 : i32
    return %arg0, %c0_i32, %arg1 : i32, i32, i32
  }
  func.func @transform_2(%arg0: i32, %arg1: i32) -> (i32, i32, i32, i32) {
    %c0_i32 = arith.constant 0 : i32
    %c0_i32_0 = arith.constant 0 : i32
    %c0_i32_1 = arith.constant 0 : i32
    return %arg0, %arg1, %c0_i32, %c0_i32_0 : i32, i32, i32, i32
  }
}

</mosaic_0001>

<llo_original>
// kernel: tpu_custom_call.1
$region0: #{tpu_custom_call.1}
  #allocation0 [shape = 'u32[]', space=smem, size = 0x4, offset = 0x4, fixed_abs, tag = 'smem constant byte address 0x4 - core index']
  #allocation1 [shape = 'u32[144,128]{1,0:T(1,128)}', space=vmem, size = 0x12000, scoped, tag = 'internal scratch']
  %s0 = inlined_call_operand.hbm [shape: f32[2,4,256], index: 0, kind: input, shape index: {}]
  %s1 = inlined_call_operand.hbm [shape: s32[2,1,256], index: 1, kind: input, shape index: {}]
  %s2 = inlined_call_operand.hbm [shape: f32[2,1,8,128], index: 2, kind: output, shape index: {}]
  %s3 = sld [smem:[#allocation0]]
  $region49: #{tpu_custom_call.1} parent=0
    _
  %s5 = ssub.s32 1, %s3
  %s6 = scalar_select 0, %s5, %s3
  $region1: #{tpu_custom_call.1} parent=0
    #allocation2 [shape = 'u8[8192]{0}', space=vmem, size = 0x2000, scoped, tag = 'input window, operand 0']
    #allocation3 [shape = 's32[2]{0}', space=sflag, size = 0x8, scoped, tag = 'scoped memory for tpu_custom_call.1']
    #allocation4 [shape = 's32[2]{0}', space=sflag, size = 0x8, scoped, tag = 'scoped memory for tpu_custom_call.1']
    #allocation5 [shape = 'u8[2048]{0}', space=vmem, size = 0x800, scoped, tag = 'input window, operand 1']
    #allocation6 [shape = 's32[2]{0}', space=sflag, size = 0x8, scoped, tag = 'scoped memory for tpu_custom_call.1']
    #allocation7 [shape = 'u8[8192]{0}', space=vmem, size = 0x2000, scoped, tag = 'output window, operand 0']
    %7 = vsyncpa [#allocation3], 0
    %s8 = scalar_lea.sflag [#allocation3], 1
    %9 = vsyncpa %s8, 0
    %10 = vsyncpa [#allocation6], 0
    %s11 = scalar_lea.sflag [#allocation6], 1
    %12 = vsyncpa %s11, 0
    %13 = vsyncpa [#allocation4], 0
    %s14 = scalar_lea.sflag [#allocation4], 1
    %15 = vsyncpa %s14, 0
    loop: start=0, step=1, limit=4
    $region2: #{tpu_custom_call.1} parent=1 // loop_pre_header
      _
    $region3: #{tpu_custom_call.1} parent=1 // loop_header
      %s17 = sphi 0, %s21
      %p18 = scmp.ge.s32.totalorder %s17, 4
      %s24 = sphi 0, %s36
      %s25 = sphi 0, %s32
      %s26 = sphi 0, %s24
      %s27 = sphi 0, %s25
      %s28 = sphi 0, %s26
      %s29 = sphi 0, %s27
      %s41 = sphi 0, %s43
      %s44 = sphi 0, %s41
      %s45 = sphi 0, %s44
      %s61 = sphi 0, %s45
      %s69 = sphi 0, %s71
      %s72 = sphi 0, %s69
      %s73 = sphi 0, %s72
      %s89 = sphi 0, %s73
      %s97 = sphi 0, %s99
      %s100 = sphi 0, %s97
      %s101 = sphi 0, %s100
      %s117 = sphi 0, %s101
    $region4: #{tpu_custom_call.1} parent=1 // loop_header_branch
      %20 = sbr.rel (%p18) target = $region8
    $region5: #{tpu_custom_call.1} parent=1 // loop_body
      %s22 = ssub.s32 %s17, 1
      %s23 = ssub.s32 %s17, 2
      %s30 = sadd.s32 1, %s25
      %p31 = scmp.ge.s32.totalorder %s30, 1
      %s32 = scalar_select %p31, 0, %s30
      %s33 = sadd.s32 1, %s24
      %s34 = scalar_select %p31, %s33, %s24
      %p35 = scmp.ge.s32.totalorder %s34, 2
      %s36 = scalar_select %p35, 0, %s34
      %s37 = ssub.s32 %s24, %s36
      %s38 = ssub.s32 %s25, %s32
      %s39 = sor.u32 %s37, %s38
      %p40 = scmp.eq.s32.totalorder %s39, 0
      %s42 = sadd.s32 %s41, 1
      %s43 = scalar_select %p40, %s41, %s42
      %p46 = pneg %p40
      %p47 = scmp.eq.s32.totalorder %s17, 1
      %p48 = por %p46, %p47
      %p49 = scmp.ne.s32.totalorder %s41, %s44
      %p50 = scmp.eq.s32.totalorder %s17, 0
      %p51 = por %p49, %p50
      %p52 = scmp.ne.s32.totalorder %s41, %s44
      %p53 = scmp.eq.s32.totalorder %s22, 1
      %p54 = por %p52, %p53
      %p55 = scmp.ne.s32.totalorder %s44, %s45
      %p56 = scmp.eq.s32.totalorder %s22, 0
      %p57 = por %p55, %p56
      %p58 = scmp.ne.s32.totalorder %s44, %s45
      %p59 = scmp.eq.s32.totalorder %s23, 1
      %p60 = por %p58, %p59
      %p62 = scmp.ne.s32.totalorder %s45, %s61
      %p63 = scmp.eq.s32.totalorder %s23, 0
      %p64 = por %p62, %p63
      %s65 = ssub.s32 %s24, %s36
      %s66 = ssub.s32 %s25, %s32
      %s67 = sor.u32 %s65, %s66
      %p68 = scmp.eq.s32.totalorder %s67, 0
      %s70 = sadd.s32 %s69, 1
      %s71 = scalar_select %p68, %s69, %s70
      %p74 = pneg %p68
      %p75 = scmp.eq.s32.totalorder %s17, 1
      %p76 = por %p74, %p75
      %p77 = scmp.ne.s32.totalorder %s69, %s72
      %p78 = scmp.eq.s32.totalorder %s17, 0
      %p79 = por %p77, %p78
      %p80 = scmp.ne.s32.totalorder %s69, %s72
      %p81 = scmp.eq.s32.totalorder %s22, 1
      %p82 = por %p80, %p81
      %p83 = scmp.ne.s32.totalorder %s72, %s73
      %p84 = scmp.eq.s32.totalorder %s22, 0
      %p85 = por %p83, %p84
      %p86 = scmp.ne.s32.totalorder %s72, %s73
      %p87 = scmp.eq.s32.totalorder %s23, 1
      %p88 = por %p86, %p87
      %p90 = scmp.ne.s32.totalorder %s73, %s89
      %p91 = scmp.eq.s32.totalorder %s23, 0
      %p92 = por %p90, %p91
      %s93 = ssub.s32 %s24, %s36
      %s94 = ssub.s32 %s25, %s32
      %s95 = sor.u32 %s93, %s94
      %p96 = scmp.eq.s32.totalorder %s95, 0
      %s98 = sadd.s32 %s97, 1
      %s99 = scalar_select %p96, %s97, %s98
      %p102 = pneg %p96
      %p103 = scmp.eq.s32.totalorder %s17, 1
      %p104 = por %p102, %p103
      %p105 = scmp.ne.s32.totalorder %s97, %s100
      %p106 = scmp.eq.s32.totalorder %s17, 0
      %p107 = por %p105, %p106
      %p108 = scmp.ne.s32.totalorder %s97, %s100
      %p109 = scmp.eq.s32.totalorder %s22, 1
      %p110 = por %p108, %p109
      %p111 = scmp.ne.s32.totalorder %s100, %s101
      %p112 = scmp.eq.s32.totalorder %s22, 0
      %p113 = por %p111, %p112
      %p114 = scmp.ne.s32.totalorder %s100, %s101
      %p115 = scmp.eq.s32.totalorder %s23, 1
      %p116 = por %p114, %p115
      %p118 = scmp.ne.s32.totalorder %s101, %s117
      %p119 = scmp.eq.s32.totalorder %s23, 0
      %p120 = por %p118, %p119
      %p121 = scmp.le.s32.totalorder 1, %s17
      %p122 = scmp.lt.s32.totalorder %s17, 3
      %p123 = pnand %p121, %p122
      %p124 = pneg %p123
      // Predicated region
      $region9: #{tpu_custom_call.1} parent=5 // pred_check
        _
      $region10: #{tpu_custom_call.1} parent=5 // pred_check_branch
        %126 = sbr.rel (%p123) target = $region12
      $region11: #{tpu_custom_call.1} parent=5 // pred_region
        %s127 = ssub.s32 %s17, 1
      $region12: #{tpu_custom_call.1} parent=5 // pred_fallthru
        _
      %p128 = scmp.lt.s32.totalorder %s17, 2
      // Predicated region
      $region13: #{tpu_custom_call.1} parent=5 // pred_check
        %p129 = pneg %p128
      $region14: #{tpu_custom_call.1} parent=5 // pred_check_branch
        %131 = sbr.rel (%p129) target = $region16
      $region15: #{tpu_custom_call.1} parent=5 // pred_region
        // Predicated region
        $region17: #{tpu_custom_call.1} parent=15 // pred_check
          %p132 = pneg %p51
        $region18: #{tpu_custom_call.1} parent=15 // pred_check_branch
          %134 = sbr.rel (%p132) target = $region20
        $region19: #{tpu_custom_call.1} parent=15 // pred_region
          %s135 = sand.u32 %s41, 1
          %s136 = scalar_lea.sflag [#allocation3], %s135
          %s137 = sand.u32 %s41, 1
          %s138 = smul.addr %s137, 8
          %s139 = scalar_lea.vmem [#allocation2], %s138
          %s140 = smul.u32 2, %s25
          %s142 = ssub.s32 128, 128
          %143 = vsyncadd %s136, %s142
          %s144 = smul.addr %s24, 2
          %s145 = sadd.s32 %s140, %s144
          %s146 = smul.addr %s145, 64
          %s147 = scalar_lea.hbm %s0, %s146
          %s149 = sshll.u32 %s139, 4
          %s150 = int_to_ptr.vmem [resolvable:$true] %s149
          %152 = dma.hbm_to_vmem [thread:$0]  %s147, 128, %s150, %s136
        $region20: #{tpu_custom_call.1} parent=15 // pred_fallthru
          _
        // Predicated region
        $region21: #{tpu_custom_call.1} parent=15 // pred_check
          %p153 = pneg %p79
        $region22: #{tpu_custom_call.1} parent=15 // pred_check_branch
          %155 = sbr.rel (%p153) target = $region24
        $region23: #{tpu_custom_call.1} parent=15 // pred_region
          %s156 = sand.u32 %s69, 1
          %s157 = scalar_lea.sflag [#allocation6], %s156
          %s158 = sand.u32 %s69, 1
          %s159 = smul.addr %s158, 2
          %s160 = scalar_lea.vmem [#allocation5], %s159
          %s161 = smul.u32 2, %s25
          %s163 = ssub.s32 32, 32
          %164 = vsyncadd %s157, %s163
          %s165 = smul.addr %s24, 2
          %s166 = sadd.s32 %s161, %s165
          %s167 = smul.addr %s166, 16
          %s168 = scalar_lea.hbm %s1, %s167
          %s170 = sshll.u32 %s160, 4
          %s171 = int_to_ptr.vmem [resolvable:$true] %s170
          %173 = dma.hbm_to_vmem [thread:$0]  %s168, 32, %s171, %s157
        $region24: #{tpu_custom_call.1} parent=15 // pred_fallthru
          _
      $region16: #{tpu_custom_call.1} parent=5 // pred_fallthru
        _
      %p174 = scmp.le.s32.totalorder 1, %s17
      %p175 = scmp.lt.s32.totalorder %s17, 3
      %p176 = pnand %p174, %p175
      %p177 = pneg %p176
      // Predicated region
      $region25: #{tpu_custom_call.1} parent=5 // pred_check
        _
      $region26: #{tpu_custom_call.1} parent=5 // pred_check_branch
        %179 = sbr.rel (%p176) target = $region28
      $region27: #{tpu_custom_call.1} parent=5 // pred_region
        %s180 = ssub.s32 %s17, 1
        %s181 = sand.u32 %s44, 1
        %s182 = scalar_lea.sflag [#allocation3], %s181
        %s183 = sand.u32 %s44, 1
        %s184 = smul.addr %s183, 8
        %s185 = scalar_lea.vmem [#allocation2], %s184
        // Predicated region
        $region29: #{tpu_custom_call.1} parent=27 // pred_check
          %p186 = pneg %p57
        $region30: #{tpu_custom_call.1} parent=27 // pred_check_branch
          %188 = sbr.rel (%p186) target = $region32
        $region31: #{tpu_custom_call.1} parent=27 // pred_region
          %189 = dma.done %s182, 128
        $region32: #{tpu_custom_call.1} parent=27 // pred_fallthru
          _
        %s190 = sand.u32 %s72, 1
        %s191 = scalar_lea.sflag [#allocation6], %s190
        %s192 = sand.u32 %s72, 1
        %s193 = smul.addr %s192, 2
        %s194 = scalar_lea.vmem [#allocation5], %s193
        // Predicated region
        $region33: #{tpu_custom_call.1} parent=27 // pred_check
          %p195 = pneg %p85
        $region34: #{tpu_custom_call.1} parent=27 // pred_check_branch
          %197 = sbr.rel (%p195) target = $region36
        $region35: #{tpu_custom_call.1} parent=27 // pred_region
          %198 = dma.done %s191, 32
        $region36: #{tpu_custom_call.1} parent=27 // pred_fallthru
          _
        %s199 = sand.u32 %s44, 1
        %s200 = scalar_lea.sflag [#allocation3], %s199
        %s201 = sand.u32 %s44, 1
        %s202 = smul.addr %s201, 8
        %s203 = scalar_lea.vmem [#allocation2], %s202
        %p204 = pneg %p57
        %p205 = pneg %p54
        %s206 = sand.u32 %s72, 1
        %s207 = scalar_lea.sflag [#allocation6], %s206
        %s208 = sand.u32 %s72, 1
        %s209 = smul.addr %s208, 2
        %s210 = scalar_lea.vmem [#allocation5], %s209
        %p211 = pneg %p85
        %p212 = pneg %p82
        %p213 = pneg %p113
        %p214 = pneg %p110
        %s215 = sand.u32 %s100, 1
        %s216 = scalar_lea.sflag [#allocation4], %s215
        %s217 = sand.u32 %s100, 1
        %s218 = smul.addr %s217, 8
        %s219 = scalar_lea.vmem [#allocation7], %s218
        %s220 = smul.u32 2, %s27
        %s221 = smul.u32 2, %s27
        %v222 = vld [vmem:[%s185] sm:$0xff]
        %v223 = vld [vmem:[%s194] sm:$0x3]
        %v225 = vcombine.high %v222, %v222
        %vm227 = vcmask 1043456
        %v228 = vsel %vm227, %v222, -inf
        %v229 = vrot.slane %v228, 4
        %v230 = vmax.f32 %v228, %v229
        %v231 = vrot.slane %v230, 2
        %v232 = vmax.f32 %v230, %v231
        %v233 = vrot.slane %v232, 1
        %v234 = vmax.f32 %v232, %v233
        %v235 = vsel %vm227, %v225, -inf
        %v236 = vrot.slane %v235, 4
        %v237 = vmax.f32 %v235, %v236
        %v238 = vrot.slane %v237, 2
        %v239 = vmax.f32 %v237, %v238
        %v240 = vrot.slane %v239, 1
        %v241 = vmax.f32 %v239, %v240
        %v244 = vcombine.low %v234, %v241
        %v246 = vsub.f32 %v222, %v244
        %v247 = vmul.f32 %v246, 1.442695
        %v248 = vpow.pop %v247
        %v250 = vcombine.high %v248, %v248
        %v252 = vsel %vm227, %v248, 0.0
        %v253 = vrot.slane %v252, 4
        %v254 = vadd.f32 %v252, %v253
        %v255 = vrot.slane %v254, 2
        %v256 = vadd.f32 %v254, %v255
        %v257 = vrot.slane %v256, 1
        %v258 = vadd.f32 %v256, %v257
        %v259 = vsel %vm227, %v250, 0.0
        %v260 = vrot.slane %v259, 4
        %v261 = vadd.f32 %v259, %v260
        %v262 = vrot.slane %v261, 2
        %v263 = vadd.f32 %v261, %v262
        %v264 = vrot.slane %v263, 1
        %v265 = vadd.f32 %v263, %v264
        %v266 = vlog2.pop %v258
        %v267 = vmul.f32 %v266, 0.6931472
        %v268 = vlog2.pop %v265
        %v269 = vmul.f32 %v268, 0.6931472
        %v272 = vcombine.low %v267, %v269
        %v274 = vsub.f32 %v246, %v272
        %v275 = vlaneseq
        %v276 = vshrl.u32 %v275, 7
        %v277 = vlaneseq
        %v278 = vshrl.u32 %v277, 7
        %v279 = vsub.s32 0, %v278
        %v280 = vrot.slane %v223, %v279
        %v281 = vlaneseq
        %v282 = vshrl.u32 %v281, 7
        %v283 = vsub.s32 1, %v282
        %v284 = vrot.slane %v223, %v283
        %vm285 = vcmp.eq.s32.totalorder %v276, %v280
        %vm286 = vcmp.eq.s32.totalorder %v276, %v284
        %v287 = vsel %vm285, 1, 0
        %v288 = vsel %vm286, 1, 0
        %v289 = vcvt.s32.f32 %v287
        %v290 = vcvt.s32.f32 %v288
        %v293 = vcombine.low %v289, %v290
        %v295 = vmul.f32 %v274, %v293
        %v297 = vcombine.high %v295, %v295
        %v299 = vsel %vm227, %v295, 0.0
        %v300 = vrot.slane %v299, 4
        %v301 = vadd.f32 %v299, %v300
        %v302 = vrot.slane %v301, 2
        %v303 = vadd.f32 %v301, %v302
        %v304 = vrot.slane %v303, 1
        %v305 = vadd.f32 %v303, %v304
        %v306 = vsel %vm227, %v297, 0.0
        %v307 = vrot.slane %v306, 4
        %v308 = vadd.f32 %v306, %v307
        %v309 = vrot.slane %v308, 2
        %v310 = vadd.f32 %v308, %v309
        %v311 = vrot.slane %v310, 1
        %v312 = vadd.f32 %v310, %v311
        %v313 = vmul.f32 %v305, 1.442695
        %v314 = vpow.pop %v313
        %v315 = vmul.f32 %v312, 1.442695
        %v316 = vpow.pop %v315
        %vm317 = vcmp.eq.s32.totalorder %v223, 0
        %v318 = vsel %vm317, 0.25, 0.0
        %vm319 = vcmp.eq.s32.totalorder %v223, 1
        %v320 = vsel %vm319, 0.75, %v318
        %vm321 = vcmp.eq.s32.totalorder %v223, 2
        %v322 = vsel %vm321, 0.5, %v320
        %vm323 = vcmp.eq.s32.totalorder %v223, 3
        %v324 = vsel %vm323, 0.9, %v322
        %v326 = vlaneseq
        %v327 = vshrl.u32 %v326, 7
        %v328 = vsub.s32 0, %v327
        %v329 = vrot.slane %v324, %v328
        %v330 = vlaneseq
        %v331 = vshrl.u32 %v330, 7
        %v332 = vsub.s32 1, %v331
        %v333 = vrot.slane %v324, %v332
        %v336 = vmul.f32 %v305, %v329
        %v337 = vmul.f32 %v312, %v333
        %v338 = vsub.f32 1.0, %v314
        %v339 = vsub.f32 1.0, %v316
        %v340 = vmul.f32 %v338, %v338
        %v341 = vmul.f32 %v339, %v339
        %v342 = vsub.f32 0.0, %v340
        %v343 = vsub.f32 0.0, %v341
        %v344 = vmul.f32 %v342, %v336
        %v345 = vmul.f32 %v343, %v337
        %vm346 = vcmask 1040384
        %v347 = vsel %vm346, %v344, 0.0
        %v348 = vsel %vm346, %v345, 0.0
        %v349 = vadd.f32 %v347, %v348
        %350 = vadd.xlane.f32.xlu0 %v349
        %v351 = vpop.xlane.xlu0 %350
        %v352 = vrot.slane %v351, 4
        %v353 = vadd.f32 %v351, %v352
        %v354 = vrot.slane %v353, 2
        %v355 = vadd.f32 %v353, %v354
        %v356 = vrot.slane %v355, 1
        %v357 = vadd.f32 %v355, %v356
        %s358 = vtos %v357
        %v359 = vstv %s358
        %360 = vst [vmem:[%s219] sm:$0xff] %v359
        %s361 = sand.u32 %s100, 1
        %s362 = scalar_lea.sflag [#allocation4], %s361
        %s363 = sand.u32 %s100, 1
        %s364 = smul.addr %s363, 8
        %s365 = scalar_lea.vmem [#allocation7], %s364
        // Predicated region
        $region37: #{tpu_custom_call.1} parent=27 // pred_check
          %p366 = pneg %p110
        $region38: #{tpu_custom_call.1} parent=27 // pred_check_branch
          %368 = sbr.rel (%p366) target = $region40
        $region39: #{tpu_custom_call.1} parent=27 // pred_region
          %s370 = ssub.s32 128, 128
          %371 = vsyncadd %s362, %s370
          %s372 = sadd.s32 %s27, %s26
          %s373 = smul.addr %s372, 128
          %s374 = scalar_lea.hbm %s2, %s373
          %s376 = sshll.u32 %s365, 4
          %s377 = int_to_ptr.vmem [resolvable:$true] %s376
          %379 = dma.vmem_to_hbm [thread:$0]  %s377, 128, %s374, %s362
        $region40: #{tpu_custom_call.1} parent=27 // pred_fallthru
          _
      $region28: #{tpu_custom_call.1} parent=5 // pred_fallthru
        _
      %p380 = scmp.le.s32.totalorder 2, %s17
      // Predicated region
      $region41: #{tpu_custom_call.1} parent=5 // pred_check
        %p381 = pneg %p380
      $region42: #{tpu_custom_call.1} parent=5 // pred_check_branch
        %383 = sbr.rel (%p381) target = $region44
      $region43: #{tpu_custom_call.1} parent=5 // pred_region
        %s384 = ssub.s32 %s17, 2
        // Predicated region
        $region45: #{tpu_custom_call.1} parent=43 // pred_check
          %p385 = pneg %p116
        $region46: #{tpu_custom_call.1} parent=43 // pred_check_branch
          %387 = sbr.rel (%p385) target = $region48
        $region47: #{tpu_custom_call.1} parent=43 // pred_region
          %s388 = sand.u32 %s101, 1
          %s389 = scalar_lea.sflag [#allocation4], %s388
          %s390 = sand.u32 %s101, 1
          %s391 = smul.addr %s390, 8
          %s392 = scalar_lea.vmem [#allocation7], %s391
          %393 = dma.done %s389, 128
        $region48: #{tpu_custom_call.1} parent=43 // pred_fallthru
          _
      $region44: #{tpu_custom_call.1} parent=5 // pred_fallthru
        _
    $region6: #{tpu_custom_call.1} parent=1 // loop_footer
      %s21 = sadd.s32 1, %s17
    $region7: #{tpu_custom_call.1} parent=1 // loop_footer_branch
      %16 = sbr.rel target = $region3
    $region8: #{tpu_custom_call.1} parent=1 // loop_exit
      _
    %394 = vsyncpa [#allocation3], 1
    %s395 = scalar_lea.sflag [#allocation3], 1
    %396 = vsyncpa %s395, 1
    %397 = vsyncpa [#allocation6], 1
    %s398 = scalar_lea.sflag [#allocation6], 1
    %399 = vsyncpa %s398, 1
    %400 = vsyncpa [#allocation4], 1
    %s401 = scalar_lea.sflag [#allocation4], 1
    %402 = vsyncpa %s401, 1

</llo_original>
